<compile_context>
chip_gen: v7x
topology: tpu7x:2x2x1
jax: 0.10.0
libtpu: 0.0.40
codegen_flags: <defaults>
</compile_context>

<pallas_src>
import math

import jax
import jax.numpy as jnp
from jax import lax
from jax.experimental import pallas as pl
from jax.experimental.pallas import tpu as pltpu


def _make_arcface_kernel(s, cos_m, sin_m, th, mm, easy_margin, tile_c):
    def kernel(x_ref, invx_ref, label_ref, w_ref, o_ref):
        j = pl.program_id(0)                              # class-tile index

        x = x_ref[...]                                    # [B, D]      (resident)
        inv_x = invx_ref[...]                             # [B, 1] f32  (resident)
        lbl = label_ref[...]                              # [B, 1] i32  (resident)
        w = w_ref[...]                                    # [TILE_C, D] (streamed)

        # Unnormalized similarities on the MXU.  Contraction is over the last dim of
        # BOTH operands (trans_b), so the native [C, D] weight layout needs no
        # transpose anywhere (wrapper or kernel).  f32 accumulation.
        dots = lax.dot_general(
            x, w, dimension_numbers=(((1,), (1,)), ((), ())),
            preferred_element_type=jnp.float32)           # [B, TILE_C]

        # Per-class inverse norms from the raw streamed tile (f32 accumulation),
        # folded into the output scale instead of normalizing the [TILE_C, D] tile.
        w_sq = jnp.sum(w * w, axis=1, dtype=jnp.float32)  # [TILE_C]
        inv_w = lax.rsqrt(w_sq + 1e-24).reshape(1, tile_c)  # [1, TILE_C]

        cosine = dots * inv_x * inv_w                     # [B, TILE_C] f32

        # Margin math in f32.  The clip keeps sqrt's argument >= 0 when |cosine|
        # overshoots 1.0 by a few ULPs (low-precision operands, f32 accumulation).
        sine = jnp.sqrt(jnp.clip(1.0 - cosine * cosine, 0.0, 1.0))
        phi = cosine * cos_m - sine * sin_m
        if easy_margin:
            phi = jnp.where(cosine > 0.0, phi, cosine)
        else:
            phi = jnp.where(cosine > th, phi, cosine - mm)

        # one_hot.scatter_(1, label, 1)  ==  a single vselect; shift the [B, 1] label
        # by the tile offset instead of adding j*TILE_C to the whole [B, TILE_C] iota.
        local_ids = lax.broadcasted_iota(jnp.int32, cosine.shape, 1)
        local_lbl = lbl - j * tile_c
        out = jnp.where(local_ids == local_lbl, phi, cosine) * s
        o_ref[...] = out.astype(o_ref.dtype)

    return kernel


def prepare_arcface_weight(weight, dtype=jnp.bfloat16):
    """One-time parameter prep (do it at module init / checkpoint load, NOT per call):
    keep the native [out_features, in_features] layout, just persist it in the MXU
    streaming dtype so the kernel reads 2 bytes/element from HBM."""
    return weight.astype(dtype)


def _pick_tile_c(B, D, w_bytes, vmem_budget_bytes):
    """Largest lane-dense class tile whose working set fits the VMEM budget."""
    resident = B * D * w_bytes + 2 * B * 4 * 128          # x + (inv_x, label) padding
    per_col = (2 * D * w_bytes                            # double-buffered W tile
               + D * w_bytes                              # w*w temp during the reduce
               + 2 * B * 4                                # double-buffered f32 output
               + 4 * B * 4)                               # cosine/sine/phi/select temps
    cap = (vmem_budget_bytes - resident) // per_col
    return int(max(128, min(cap, 4096)))


def arcface_forward(x, weight, label, *, s=30.0, m=0.5, easy_margin=False,
                    tile_c=None, vmem_budget_bytes=20 * 1024 * 1024,
                    vmem_limit_bytes=32 * 1024 * 1024, out_dtype=jnp.float32):
    """x: [B, D] float, weight: [C, D] float (pass through prepare_arcface_weight once
    for bf16 streaming), label: [B] int  ->  [B, C] scaled ArcFace logits."""
    B, D = x.shape
    C, D2 = weight.shape
    assert D == D2, "weight must be [out_features, in_features]"

    w_bytes = jnp.dtype(weight.dtype).itemsize

    if tile_c is None:
        tile_c = _pick_tile_c(B, D, w_bytes, vmem_budget_bytes)
    if C <= tile_c:
        tile_c = C                                        # single exact tile (== full dims)
    else:
        tile_c = max(128, (int(tile_c) // 128) * 128)     # lane-dense 128-multiple
    n_tiles = pl.cdiv(C, tile_c)                          # ragged last tile: masked write
    # TODO(synk): if n_tiles == 1 on v7x, add a parallel B grid axis (one class tile
    # leaves the second TensorCore idle).

    # Hoisted per-batch work (amortized over the whole class stream): inv_x in f32 and
    # x pre-cast to the weight's streaming dtype for the MXU.
    xf = x.astype(jnp.float32)
    inv_x = lax.rsqrt(jnp.sum(xf * xf, axis=-1, keepdims=True) + 1e-24)   # [B, 1] f32
    x_mxu = xf.astype(weight.dtype)
    label2d = label.reshape(B, 1).astype(jnp.int32)

    kernel = _make_arcface_kernel(
        s=float(s),
        cos_m=math.cos(m),
        sin_m=math.sin(m),
        th=math.cos(math.pi - m),
        mm=math.sin(math.pi - m) * m,
        easy_margin=easy_margin,
        tile_c=tile_c,
    )

    n_cols = n_tiles * tile_c
    out_bytes = jnp.dtype(out_dtype).itemsize
    cost = pl.CostEstimate(
        flops=2 * B * n_cols * D + 3 * n_cols * D + 12 * B * n_cols,
        transcendentals=n_cols + B * n_cols,              # per-tile rsqrt + sine sqrt
        bytes_accessed=(B * D * w_bytes                   # x (resident, read once)
                        + n_cols * D * w_bytes            # streamed weight tiles
                        + B * C * out_bytes               # output write
                        + B * 8),                         # inv_x + label
    )

    return pl.pallas_call(
        kernel,
        out_shape=jax.ShapeDtypeStruct((B, C), out_dtype),
        grid=(n_tiles,),
        in_specs=[
            pl.BlockSpec((B, D), lambda j: (0, 0)),       # x: full-resident
            pl.BlockSpec((B, 1), lambda j: (0, 0)),       # inv_x: full-resident
            pl.BlockSpec((B, 1), lambda j: (0, 0)),       # label: full-resident
            pl.BlockSpec((tile_c, D), lambda j: (j, 0)),  # W: streamed native [C, D]
        ],
        out_specs=pl.BlockSpec((B, tile_c), lambda j: (0, j)),
        compiler_params=pltpu.CompilerParams(
            dimension_semantics=("parallel",),            # megacore-shard the class grid
            vmem_limit_bytes=int(vmem_limit_bytes),
        ),
        cost_estimate=cost,
    )(x_mxu, inv_x, label2d, weight)


def _xavier_uniform(key, out_features, in_features):
    # torch.nn.init.xavier_uniform_ on a (out, in) matrix.
    bound = math.sqrt(6.0 / (in_features + out_features))
    return jax.random.uniform(key, (out_features, in_features), dtype=jnp.float32,
                              minval=-bound, maxval=bound)


def _arcface_reference(x, weight, label, *, s=30.0, m=0.5, easy_margin=False):
    """Pure-JAX f32 reference matching the PyTorch module."""
    xn = x / jnp.maximum(jnp.linalg.norm(x, axis=1, keepdims=True), 1e-12)
    wn = weight / jnp.maximum(jnp.linalg.norm(weight, axis=1, keepdims=True), 1e-12)
    cosine = xn @ wn.T
    sine = jnp.sqrt(jnp.clip(1.0 - cosine * cosine, 0.0, 1.0))
    phi = cosine * math.cos(m) - sine * math.sin(m)
    if easy_margin:
        phi = jnp.where(cosine > 0.0, phi, cosine)
    else:
        phi = jnp.where(cosine > math.cos(math.pi - m), phi,
                        cosine - math.sin(math.pi - m) * m)
    one_hot = jax.nn.one_hot(label, weight.shape[0], dtype=jnp.float32)
    return (one_hot * phi + (1.0 - one_hot) * cosine) * s


if __name__ == "__main__":
    key = jax.random.PRNGKey(0)
    kx, kw, kl = jax.random.split(key, 3)

    B = 8     # batch
    D = 32    # in_features
    C = 16    # out_features (classes)

    x = jax.random.normal(kx, (B, D), dtype=jnp.float32)
    weight = _xavier_uniform(kw, C, D)
    label = jax.random.randint(kl, (B,), 0, C, dtype=jnp.int32)

    # Persist the parameter in the streaming dtype ONCE (module init), not per call.
    w_stream = prepare_arcface_weight(weight, jnp.bfloat16)

    out = arcface_forward(x, w_stream, label, s=30.0, m=0.5, easy_margin=False)
    out = jax.block_until_ready(out)

    ref = _arcface_reference(x, weight, label, s=30.0, m=0.5, easy_margin=False)

    assert out.shape == (B, C) and out.dtype == jnp.float32
    assert bool(jnp.all(jnp.isfinite(out)))
    # Loose tolerance: the kernel streams bf16 weights / bf16 x to the MXU (f32
    # accumulation) and derives class norms from the bf16 tile, while the reference
    # is pure f32.
    assert bool(jnp.allclose(out, ref, rtol=5e-2, atol=1.0)), (
        "max abs err = %f" % float(jnp.max(jnp.abs(out - ref))))
    print("KERNEL_OK")
</pallas_src>

<mosaic_0001>
module attributes {stable_mosaic.version = 11 : i64} {
  func.func @kernel(%arg0: i32, %arg1: memref<8x32xbf16, #tpu.memory_space<vmem>>, %arg2: memref<8x1xf32, #tpu.memory_space<vmem>>, %arg3: memref<8x1xi32, #tpu.memory_space<vmem>>, %arg4: memref<16x32xbf16, #tpu.memory_space<vmem>>, %arg5: memref<8x16xf32, #tpu.memory_space<vmem>>) attributes {dimension_semantics = [#tpu.dimension_semantics<parallel>], iteration_bounds = array<i64: 1>, scalar_prefetch = 0 : i64, scratch_operands = 0 : i64, tpu.core_type = #tpu.core_type<tc>, window_params = [{pipeline_mode = #tpu.pipeline_mode<synchronous>, transform_indices = @transform_0, window_bounds = array<i64: 8, 32>}, {pipeline_mode = #tpu.pipeline_mode<synchronous>, transform_indices = @transform_1, window_bounds = array<i64: 8, 1>}, {pipeline_mode = #tpu.pipeline_mode<synchronous>, transform_indices = @transform_2, window_bounds = array<i64: 8, 1>}, {transform_indices = @transform_3, window_bounds = array<i64: 16, 32>}, {transform_indices = @transform_4, window_bounds = array<i64: 8, 16>}]} {
    %c0 = arith.constant 0 : index
    %c0_0 = arith.constant 0 : index
    %0 = vector.load %arg1[%c0, %c0_0] : memref<8x32xbf16, #tpu.memory_space<vmem>>, vector<8x32xbf16>
    %c0_1 = arith.constant 0 : index
    %c0_2 = arith.constant 0 : index
    %1 = vector.load %arg2[%c0_1, %c0_2] : memref<8x1xf32, #tpu.memory_space<vmem>>, vector<8x1xf32>
    %c0_3 = arith.constant 0 : index
    %c0_4 = arith.constant 0 : index
    %2 = vector.load %arg3[%c0_3, %c0_4] : memref<8x1xi32, #tpu.memory_space<vmem>>, vector<8x1xi32>
    %c0_5 = arith.constant 0 : index
    %c0_6 = arith.constant 0 : index
    %3 = vector.load %arg4[%c0_5, %c0_6] : memref<16x32xbf16, #tpu.memory_space<vmem>>, vector<16x32xbf16>
    %cst = arith.constant dense<0.000000e+00> : vector<8x16xf32>
    %4 = tpu.matmul %0, %3, %cst {dimension_numbers = #tpu.dot_dimension_numbers<[1], [1], [0], [0], [0, 0, 1, 0], [], []>} : vector<8x32xbf16>, vector<16x32xbf16>, vector<8x16xf32> -> vector<8x16xf32>
    %5 = arith.mulf %3, %3 : vector<16x32xbf16>
    %6 = arith.extf %5 : vector<16x32xbf16> to vector<16x32xf32>
    %cst_7 = arith.constant dense<0.000000e+00> : vector<16xf32>
    %7 = vector.multi_reduction <add>, %6, %cst_7 [1] : vector<16x32xf32> to vector<16xf32>
    %cst_8 = arith.constant 1.000000e-24 : f32
    %8 = vector.broadcast %cst_8 : f32 to vector<16xf32>
    %9 = arith.addf %7, %8 : vector<16xf32>
    %10 = math.rsqrt %9 : vector<16xf32>
    %11 = vector.shape_cast %10 : vector<16xf32> to vector<1x16xf32>
    %12 = vector.broadcast %1 : vector<8x1xf32> to vector<8x16xf32>
    %13 = arith.mulf %4, %12 : vector<8x16xf32>
    %14 = vector.broadcast %11 : vector<1x16xf32> to vector<8x16xf32>
    %15 = arith.mulf %13, %14 : vector<8x16xf32>
    %16 = arith.mulf %15, %15 : vector<8x16xf32>
    %cst_9 = arith.constant 1.000000e+00 : f32
    %17 = vector.broadcast %cst_9 : f32 to vector<8x16xf32>
    %18 = arith.subf %17, %16 : vector<8x16xf32>
    %cst_10 = arith.constant 0.000000e+00 : f32
    %cst_11 = arith.constant 1.000000e+00 : f32
    %19 = vector.broadcast %cst_10 : f32 to vector<8x16xf32>
    %20 = arith.maximumf %19, %18 : vector<8x16xf32>
    %21 = vector.broadcast %cst_11 : f32 to vector<8x16xf32>
    %22 = arith.minimumf %21, %20 : vector<8x16xf32>
    %23 = math.sqrt %22 : vector<8x16xf32>
    %cst_12 = arith.constant 0.87758255 : f32
    %24 = vector.broadcast %cst_12 : f32 to vector<8x16xf32>
    %25 = arith.mulf %15, %24 : vector<8x16xf32>
    %cst_13 = arith.constant 0.47942555 : f32
    %26 = vector.broadcast %cst_13 : f32 to vector<8x16xf32>
    %27 = arith.mulf %23, %26 : vector<8x16xf32>
    %28 = arith.subf %25, %27 : vector<8x16xf32>
    %cst_14 = arith.constant -0.87758255 : f32
    %29 = vector.broadcast %cst_14 : f32 to vector<8x16xf32>
    %30 = arith.cmpf ogt, %15, %29 : vector<8x16xf32>
    %cst_15 = arith.constant 0.239712775 : f32
    %31 = vector.broadcast %cst_15 : f32 to vector<8x16xf32>
    %32 = arith.subf %15, %31 : vector<8x16xf32>
    %33 = arith.select %30, %28, %32 : vector<8x16xi1>, vector<8x16xf32>
    %34 = tpu.iota {dimensions = array<i32: 1>} : vector<8x16xi32>
    %c16_i32 = arith.constant 16 : i32
    %35 = arith.muli %arg0, %c16_i32 : i32
    %36 = vector.broadcast %35 : i32 to vector<8x1xi32>
    %37 = arith.subi %2, %36 : vector<8x1xi32>
    %38 = vector.broadcast %37 : vector<8x1xi32> to vector<8x16xi32>
    %39 = arith.cmpi eq, %34, %38 : vector<8x16xi32>
    %40 = arith.select %39, %33, %15 : vector<8x16xi1>, vector<8x16xf32>
    %cst_16 = arith.constant 3.000000e+01 : f32
    %41 = vector.broadcast %cst_16 : f32 to vector<8x16xf32>
    %42 = arith.mulf %40, %41 : vector<8x16xf32>
    %c0_17 = arith.constant 0 : index
    %c0_18 = arith.constant 0 : index
    %43 = vector.load %arg5[%c0_17, %c0_18] : memref<8x16xf32, #tpu.memory_space<vmem>>, vector<8x16xf32>
    tpu.vector_store %arg5[%c0_17, %c0_18], %42 {strides = array<i32>} : memref<8x16xf32, #tpu.memory_space<vmem>>, vector<8x16xf32>,
    return
  }
  func.func @transform_0(%arg0: i32) -> (i32, i32) {
    %c0_i32 = arith.constant 0 : i32
    %c0_i32_0 = arith.constant 0 : i32
    %c0_i32_1 = arith.constant 0 : i32
    return %c0_i32, %c0_i32_0 : i32, i32
  }
  func.func @transform_1(%arg0: i32) -> (i32, i32) {
    %c0_i32 = arith.constant 0 : i32
    %c0_i32_0 = arith.constant 0 : i32
    %c0_i32_1 = arith.constant 0 : i32
    return %c0_i32, %c0_i32_0 : i32, i32
  }
  func.func @transform_2(%arg0: i32) -> (i32, i32) {
    %c0_i32 = arith.constant 0 : i32
    %c0_i32_0 = arith.constant 0 : i32
    %c0_i32_1 = arith.constant 0 : i32
    return %c0_i32, %c0_i32_0 : i32, i32
  }
  func.func @transform_3(%arg0: i32) -> (i32, i32) {
    %c0_i32 = arith.constant 0 : i32
    %c0_i32_0 = arith.constant 0 : i32
    return %arg0, %c0_i32 : i32, i32
  }
  func.func @transform_4(%arg0: i32) -> (i32, i32) {
    %c0_i32 = arith.constant 0 : i32
    %c0_i32_0 = arith.constant 0 : i32
    return %c0_i32, %arg0 : i32, i32
  }
}

</mosaic_0001>

<llo_original>
// kernel: tpu_custom_call.1
$region0: #{tpu_custom_call.1}
  #allocation0 [shape = 'u32[]', space=smem, size = 0x4, offset = 0x4, fixed_abs, tag = 'smem constant byte address 0x4 - core index']
  #allocation1 [shape = 'u32[144,128]{1,0:T(1,128)}', space=vmem, size = 0x12000, scoped, tag = 'internal scratch']
  %s0 = inlined_call_operand.vmem [shape: bf16[8,32], index: 0, kind: input, shape index: {}]
  %s1 = inlined_call_operand.vmem [shape: f32[8,1], index: 1, kind: input, shape index: {}]
  %s2 = inlined_call_operand.vmem [shape: s32[8,1], index: 2, kind: input, shape index: {}]
  %s3 = inlined_call_operand.vmem [shape: bf16[16,32], index: 3, kind: input, shape index: {}]
  %s4 = inlined_call_operand.hbm [shape: f32[8,16], index: 4, kind: output, shape index: {}]
  %s5 = sld [smem:[#allocation0]]
  $region26: #{tpu_custom_call.1} parent=0
    _
  %s7 = ssub.s32 1, %s5
  %s8 = scalar_select 0, %s7, %s5
  $region1: #{tpu_custom_call.1} parent=0
    #allocation2 [shape = 'u8[4096]{0}', space=vmem, size = 0x1000, scoped, tag = 'output window, operand 0, single buffered']
    #allocation3 [shape = 's32[1]{0}', space=sflag, size = 0x4, scoped, tag = 'scoped memory for tpu_custom_call.1']
    %9 = vsyncpa [#allocation3], 0
    // Predicated region
    $region2: #{tpu_custom_call.1} parent=1 // pred_check
      _
    $region3: #{tpu_custom_call.1} parent=1 // pred_check_branch
      %11 = sbr.rel (0) target = $region5
    $region4: #{tpu_custom_call.1} parent=1 // pred_region
      _
    $region5: #{tpu_custom_call.1} parent=1 // pred_fallthru
      _
    // Predicated region
    $region6: #{tpu_custom_call.1} parent=1 // pred_check
      _
    $region7: #{tpu_custom_call.1} parent=1 // pred_check_branch
      %13 = sbr.rel (0) target = $region9
    $region8: #{tpu_custom_call.1} parent=1 // pred_region
      _
    $region9: #{tpu_custom_call.1} parent=1 // pred_fallthru
      _
    // Predicated region
    $region10: #{tpu_custom_call.1} parent=1 // pred_check
      _
    $region11: #{tpu_custom_call.1} parent=1 // pred_check_branch
      %15 = sbr.rel (0) target = $region13
    $region12: #{tpu_custom_call.1} parent=1 // pred_region
      _
    $region13: #{tpu_custom_call.1} parent=1 // pred_fallthru
      _
    // Predicated region
    $region14: #{tpu_custom_call.1} parent=1 // pred_check
      _
    $region15: #{tpu_custom_call.1} parent=1 // pred_check_branch
      %17 = sbr.rel (0) target = $region17
    $region16: #{tpu_custom_call.1} parent=1 // pred_region
      _
    $region17: #{tpu_custom_call.1} parent=1 // pred_fallthru
      _
    %v19 = vld [vmem:[%s0] sm:$0xf]
    %v20 = vld [vmem:[%s1] sm:$0xff]
    %v21 = vld [vmem:[%s2] sm:$0xff]
    %v22 = vld [vmem:[%s3] sm:$0xf]
    %v23 = vld [vmem:[%s3 + $0x4] sm:$0xf]
    %v26 = vunpack.c.l.b16 %v22
    %v27 = vunpack.c.l.b16 %v23
    %v28 = vpack.c.b16 %v27, %v26
    %vm29 = vcmask 261120
    %v31 = vsel %vm29, %v19, 0
    %v34 = vsel %vm29, %v28, 0
    %36 = vmatprep.subr.bf16.mxu0 0
    %37 = vmatpush1.bf16.xpose.msra.mxu0 %v34
    %38 = vmatprep.subr.bf16.mxu0 0
    %39 = vmatpush1.bf16.xpose.msra.mxu0 0
    %40 = vmatprep.subr.bf16.mxu0 0
    %41 = vmatpush1.bf16.xpose.msra.mxu0 0
    %42 = vmatprep.subr.bf16.mxu0 0
    %43 = vmatpush1.bf16.xpose.msra.mxu0 0
    %44 = vmatprep.subr.bf16.mxu0 0
    %45 = vmatpush1.bf16.xpose.msra.mxu0 0
    %46 = vmatprep.subr.bf16.mxu0 0
    %47 = vmatpush1.bf16.xpose.msra.mxu0 0
    %48 = vmatprep.subr.bf16.mxu0 0
    %49 = vmatpush1.bf16.xpose.msra.mxu0 0
    %50 = vmatprep.subr.bf16.mxu0 0
    %51 = vmatpush1.bf16.xpose.msra.mxu0 0
    %52 = vmatprep.subr.bf16.mxu0 0
    %53 = vmatpush1.bf16.xpose.msra.mxu0 0
    %54 = vmatprep.subr.bf16.mxu0 0
    %55 = vmatpush1.bf16.xpose.msra.mxu0 0
    %56 = vmatprep.subr.bf16.mxu0 0
    %57 = vmatpush1.bf16.xpose.msra.mxu0 0
    %58 = vmatprep.subr.bf16.mxu0 0
    %59 = vmatpush1.bf16.xpose.msra.mxu0 0
    %60 = vmatprep.subr.bf16.mxu0 0
    %61 = vmatpush1.bf16.xpose.msra.mxu0 0
    %62 = vmatprep.subr.bf16.mxu0 0
    %63 = vmatpush1.bf16.xpose.msra.mxu0 0
    %64 = vmatprep.subr.bf16.mxu0 0
    %65 = vmatpush1.bf16.xpose.msra.mxu0 0
    %66 = vmatprep.subr.bf16.mxu0 0
    %67 = vmatpush1.bf16.xpose.msra.mxu0 0
    %68 = vmatprep.mubr.bf16.mxu0 0
    %69 = vmatmul.mubr.bf16.gmra.mrb[0].mxu0 %v31
    %v70 = vpop.f32.mrb[0].mxu0
    %v71 = vadd.f32 0.0, %v70
    %v72 = vpop.f32.mrb[0].mxu0
    %v73 = vpop.f32.mrb[0].mxu0
    %v74 = vpop.f32.mrb[0].mxu0
    %75 = vdwg.mxu0
    %v76 = vmul.bf16 %v22, %v22
    %v77 = vmul.bf16 %v23, %v23
    %v78 = vunpack.c.l.bf16 %v76
    %v79 = vunpack.c.l.bf16 %v77
    %v80 = vsel %vm29, %v78, 0.0
    %81 = vadd.xlane.f32.xlu0 %v80
    %v82 = vpop.xlane.xlu0 %81
    %v83 = vsel %vm29, %v79, 0.0
    %84 = vadd.xlane.f32.xlu0 %v83
    %v85 = vpop.xlane.xlu0 %84
    %v86 = vadd.f32 %v82, 1e-24
    %v87 = vadd.f32 %v85, 1e-24
    %v88 = vrsqrt.pop %v86
    %v89 = vrsqrt.pop %v87
    %91 = vset.pattern.permute.xlu0 0
    %92 = vperm.xlu0 %91, %v20
    %v93 = vpop.permute.xlu0 %92
    %v95 = vmul.f32 %v71, %v93
    %v98 = vlaneseq
    %v99 = vand.u32 %v98, 127
    %v100 = vlaneseq
    %v101 = vshrl.u32 %v100, 7
    %v102 = vsub.s32 %v99, %v101
    %v103 = vrot.slane %v88, %v102
    %v104 = vadd.s32 %v99, 4294967288
    %v105 = vlaneseq
    %v106 = vshrl.u32 %v105, 7
    %v107 = vsub.s32 %v104, %v106
    %v108 = vrot.slane %v89, %v107
    %vm109 = vcmask 130112
    %v110 = vsel %vm109, %v108, %v103
    %vm111 = vcmask 1042434
    %v112 = vsel %vm111, %v110, %v110
    %vm113 = vcmask 1043459
    %v114 = vsel %vm113, %v110, %v112
    %vm115 = vcmask 1044484
    %v116 = vsel %vm115, %v110, %v114
    %vm117 = vcmask 1045509
    %v118 = vsel %vm117, %v110, %v116
    %vm119 = vcmask 1046534
    %v120 = vsel %vm119, %v110, %v118
    %vm121 = vcmask 1047559
    %v122 = vsel %vm121, %v110, %v120
    %v124 = vmul.f32 %v95, %v122
    %v125 = vmul.f32 %v124, %v124
    %v126 = vsub.f32 1.0, %v125
    %v127 = vmax.f32 %v126, 0.0
    %v128 = vmin.f32 %v127, 1.0
    %v129 = vrsqrt.pop %v128
    %v130 = vmul.f32 %v128, %v129
    %vm131 = vcmp.eq.f32.partialorder %v128, inf
    %v132 = vsel %vm131, %v128, %v130
    %vm133 = vcmp.eq.f32.partialorder %v128, 0.0
    %v134 = vand.u32 %v128, 2147483648
    %v135 = vsel %vm133, %v134, %v132
    %v136 = vmul.f32 %v124, 0.87758255
    %v137 = vmul.f32 %v135, 0.47942555
    %v138 = vsub.f32 %v136, %v137
    %vm139 = vcmp.gt.f32.partialorder %v124, -0.87758255
    %v140 = vsub.f32 %v124, 0.23971277
    %v141 = vsel %vm139, %v138, %v140
    %s142 = smul.u32 0, 16
    %v143 = vstv %s142
    %v144 = vsub.s32 %v21, %v143
    %145 = vset.pattern.permute.xlu0 0
    %146 = vperm.xlu0 %145, %v144
    %v147 = vpop.permute.xlu0 %146
    %vm148 = vcmp.eq.s32.totalorder %v99, %v147
    %v149 = vsel %vm148, %v141, %v124
    %v150 = vmul.f32 %v149, 30.0
    %vm151 = vcmask 130048
    %152 = vst.msk [vmem:[#allocation2] sm:$0xff] %vm151, %v150
    // Predicated region
    $region18: #{tpu_custom_call.1} parent=1 // pred_check
      _
    $region19: #{tpu_custom_call.1} parent=1 // pred_check_branch
      %154 = sbr.rel (0) target = $region21
    $region20: #{tpu_custom_call.1} parent=1 // pred_region
      %s156 = ssub.s32 128, 128
      %157 = vsyncadd [#allocation3], %s156
      %s159 = sshll.u32 [#allocation2], 4
      %s160 = int_to_ptr.vmem [resolvable:$true] %s159
      %162 = dma.vmem_to_hbm [thread:$0]  %s160, 128, %s4, [#allocation3]
    $region21: #{tpu_custom_call.1} parent=1 // pred_fallthru
      _
    // Predicated region
    $region22: #{tpu_custom_call.1} parent=1 // pred_check
      _
    $region23: #{tpu_custom_call.1} parent=1 // pred_check_branch
      %164 = sbr.rel (0) target = $region25
    $region24: #{tpu_custom_call.1} parent=1 // pred_region
      %165 = dma.done [#allocation3], 128
    $region25: #{tpu_custom_call.1} parent=1 // pred_fallthru
      _
    %166 = vsyncpa [#allocation3], 1

</llo_original>
